<compile_context>
chip_gen: v7x
topology: tpu7x:2x2x1
jax: 0.10.0
libtpu: 0.0.40
codegen_flags: <defaults>
</compile_context>

<pallas_src>
import jax
import jax.numpy as jnp
from jax.experimental import pallas as pl
from jax.experimental.pallas import tpu as pltpu


def _round_up(x, m):
    return (x + m - 1) // m * m


def ufm2_head_kernel(
    x_ref,        # (TB, F)    tabular input tile
    text_ref,     # (TB, T)    text embedding tile
    e_w1_ref,     # (F, FHp)   expansion matrix with w1 folded in
    b1_ref,       # (1, FHp)   NAM layer-1 biases, flattened + zero-padded
    et_w2_ref,    # (FHp, Fp)  segment-sum matrix with w2 folded in
    b2_ref,       # (1, Fp)    NAM layer-2 biases, zero-padded past F
    red_ref,      # (FHp, 1)   tab-score reduction column (w2 * wfc00)
    wt_ref,       # (T, 1)     text_proj weight column, pre-scaled by wfc01
    bias_ref,     # (1, 1)     fused scalar bias (SMEM)
    out_ref,      # (TB, 1)    final score tile
    contrib_ref,  # (TB, Fp)   per-feature NAM contributions (lane-padded)
):
    x = x_ref[...]                                                       # (TB, F)

    # Hidden activations of every per-feature MLP, lane-dense:
    #   h[b, f*H + j] = relu(x[b, f] * w1[f, j] + b1[f, j])
    h = jnp.maximum(
        jnp.dot(x, e_w1_ref[...], preferred_element_type=jnp.float32)
        + b1_ref[...],
        0.0,
    )                                                                    # (TB, FHp)

    # Segment-sum over H on the MXU (w2 folded into Et):
    #   contrib[b, f] = sum_j h[b, f*H+j] * w2[f, j] + b2[f]
    contrib_ref[...] = (
        jnp.dot(h, et_w2_ref[...], preferred_element_type=jnp.float32)
        + b2_ref[...]
    )                                                                    # (TB, Fp)

    # Final score; fc weights are pre-folded into red_ref / wt_ref / bias_ref.
    tab = jnp.dot(h, red_ref[...], preferred_element_type=jnp.float32)            # (TB, 1)
    txt = jnp.dot(text_ref[...], wt_ref[...], preferred_element_type=jnp.float32) # (TB, 1)
    out_ref[...] = tab + txt + bias_ref[0, 0]


def ufm2_reasoning_head(tabular_input, text_embed, params, *, tb=None,
                        vmem_budget_bytes=16 * 1024 * 1024):
    B, F = tabular_input.shape
    _, T = text_embed.shape
    H = params["w1"].shape[1]
    assert params["w1"].shape == (F, H)

    f32 = jnp.float32
    FH = F * H
    FHp = _round_up(FH, 128)   # lane-dense width for the NAM hidden layer
    Fp = _round_up(F, 128)     # lane-dense width for the contrib output slab

    # ---- one-time parameter repacking (wrapper-side, outside the kernel) ----
    w1 = params["w1"].astype(f32)
    b1 = params["b1"].astype(f32)
    w2 = params["w2"].astype(f32)
    b2 = params["b2"].astype(f32)
    wt = params["wt"].astype(f32)
    bt = params["bt"].astype(f32)
    wfc = params["wfc"].astype(f32)
    bfc = params["bfc"].astype(f32)

    e_one = jnp.kron(jnp.eye(F, dtype=f32), jnp.ones((1, H), f32))       # (F, FH)
    et_one = jnp.kron(jnp.eye(F, dtype=f32), jnp.ones((H, 1), f32))      # (FH, F)

    e_w1 = jnp.zeros((F, FHp), f32).at[:, :FH].set(e_one * w1.reshape(1, -1))
    b1_flat = jnp.zeros((1, FHp), f32).at[:, :FH].set(b1.reshape(1, -1))
    et_w2 = jnp.zeros((FHp, Fp), f32).at[:FH, :F].set(et_one * w2.reshape(-1, 1))
    b2_pad = jnp.zeros((1, Fp), f32).at[:, :F].set(b2)

    red_big = jnp.zeros((FHp, 1), f32).at[:FH, :].set(w2.reshape(-1, 1) * wfc[0, 0])
    wt_col = wt.T * wfc[0, 1]                                            # (T, 1)
    fused_bias = (jnp.sum(b2) * wfc[0, 0]
                  + bt[0, 0] * wfc[0, 1]
                  + bfc[0, 0]).reshape(1, 1)                             # (1, 1)

    # ---- batch tile: biggest multiple-of-8 tile that keeps the f32 working set
    # (double-buffered I/O + (TB, FHp) hidden activations) inside budget, sized
    # conservatively so it also fits v7x's smaller (64 MiB) VMEM. ----
    if tb is None:
        bytes_per_row = 4 * (2 * (F + T) + 2 * (Fp + 1) + 2 * FHp)
        tb = vmem_budget_bytes // max(bytes_per_row, 1)
    tb = int(min(tb, B))
    if tb < B:
        tb = max(8, (tb // 8) * 8)
    grid = (pl.cdiv(B, tb),)

    rep = lambda i: (0, 0)   # parameter blocks: same block every grid step
    row = lambda i: (i, 0)   # batch-tiled arrays

    out, contrib_pad = pl.pallas_call(
        ufm2_head_kernel,
        out_shape=(
            jax.ShapeDtypeStruct((B, 1), f32),
            jax.ShapeDtypeStruct((B, Fp), f32),
        ),
        grid=grid,
        in_specs=[
            pl.BlockSpec((tb, F), row),          # x
            pl.BlockSpec((tb, T), row),          # text
            pl.BlockSpec((F, FHp), rep),         # E * w1
            pl.BlockSpec((1, FHp), rep),         # b1 (flattened, padded)
            pl.BlockSpec((FHp, Fp), rep),        # E^T * w2 (padded)
            pl.BlockSpec((1, Fp), rep),          # b2 (padded)
            pl.BlockSpec((FHp, 1), rep),         # tab reduction column
            pl.BlockSpec((T, 1), rep),           # text_proj column (pre-scaled)
            pl.BlockSpec(memory_space=pltpu.MemorySpace.SMEM),  # fused scalar bias
        ],
        out_specs=(
            pl.BlockSpec((tb, 1), row),
            pl.BlockSpec((tb, Fp), row),         # lane-dense contrib slab
        ),
        compiler_params=pltpu.CompilerParams(
            dimension_semantics=("parallel",),   # shards batch tiles across TCs on v7x
            vmem_limit_bytes=32 * 1024 * 1024,
        ),
    )(
        tabular_input.astype(f32),
        text_embed.astype(f32),
        e_w1, b1_flat, et_w2, b2_pad, red_big, wt_col, fused_bias,
    )
    return out, contrib_pad[:, :F]


def init_params(key, tabular_dim, text_dim, hidden):
    ks = jax.random.split(key, 8)
    s = 0.1
    return {
        "w1":  s * jax.random.normal(ks[0], (tabular_dim, hidden), jnp.float32),
        "b1":  s * jax.random.normal(ks[1], (tabular_dim, hidden), jnp.float32),
        "w2":  s * jax.random.normal(ks[2], (tabular_dim, hidden), jnp.float32),
        "b2":  s * jax.random.normal(ks[3], (1, tabular_dim), jnp.float32),
        "wt":  s * jax.random.normal(ks[4], (1, text_dim), jnp.float32),
        "bt":  s * jax.random.normal(ks[5], (1, 1), jnp.float32),
        "wfc": s * jax.random.normal(ks[6], (1, 2), jnp.float32),
        "bfc": s * jax.random.normal(ks[7], (1, 1), jnp.float32),
    }


def _reference(tabular_input, text_embed, p):
    # Pure-JAX reference of the same forward pass (for a sanity check).
    h = jnp.maximum(tabular_input[:, :, None] * p["w1"][None] + p["b1"][None], 0.0)
    contrib = jnp.sum(h * p["w2"][None], axis=-1) + p["b2"]
    tab_score = jnp.sum(contrib, axis=-1, keepdims=True)
    text_score = text_embed @ p["wt"].T + p["bt"][0, 0]
    combined = jnp.concatenate([tab_score, text_score], axis=1)
    out = combined @ p["wfc"].T + p["bfc"][0, 0]
    return out, contrib


if __name__ == "__main__":
    B, TAB_DIM, TEXT_DIM, HIDDEN = 128, 8, 32, 32

    key = jax.random.PRNGKey(0)
    k_tab, k_text, k_param = jax.random.split(key, 3)
    tabular_input = jax.random.normal(k_tab, (B, TAB_DIM), jnp.float32)
    text_embed = jax.random.normal(k_text, (B, TEXT_DIM), jnp.float32)
    params = init_params(k_param, TAB_DIM, TEXT_DIM, HIDDEN)

    # tb=32 -> grid of 4 batch tiles, exercising the double-buffered pipeline.
    out, contribs = ufm2_reasoning_head(tabular_input, text_embed, params, tb=32)
    jax.block_until_ready((out, contribs))

    ref_out, ref_contribs = _reference(tabular_input, text_embed, params)
    assert out.shape == (B, 1) and contribs.shape == (B, TAB_DIM)
    assert jnp.allclose(out, ref_out, atol=1e-5), "output mismatch"
    assert jnp.allclose(contribs, ref_contribs, atol=1e-5), "contribs mismatch"

    print("KERNEL_OK")
</pallas_src>

<mosaic_0001>
module attributes {stable_mosaic.version = 11 : i64} {
  func.func @ufm2_head_kernel(%arg0: i32, %arg1: memref<32x8xf32, #tpu.memory_space<vmem>>, %arg2: memref<32x32xf32, #tpu.memory_space<vmem>>, %arg3: memref<8x256xf32, #tpu.memory_space<vmem>>, %arg4: memref<1x256xf32, #tpu.memory_space<vmem>>, %arg5: memref<256x128xf32, #tpu.memory_space<vmem>>, %arg6: memref<1x128xf32, #tpu.memory_space<vmem>>, %arg7: memref<256x1xf32, #tpu.memory_space<vmem>>, %arg8: memref<32x1xf32, #tpu.memory_space<vmem>>, %arg9: memref<1x1xf32, #tpu.memory_space<smem>>, %arg10: memref<32x1xf32, #tpu.memory_space<vmem>>, %arg11: memref<32x128xf32, #tpu.memory_space<vmem>>) attributes {dimension_semantics = [#tpu.dimension_semantics<parallel>], iteration_bounds = array<i64: 4>, scalar_prefetch = 0 : i64, scratch_operands = 0 : i64, tpu.core_type = #tpu.core_type<tc>, window_params = [{transform_indices = @transform_0, window_bounds = array<i64: 32, 8>}, {transform_indices = @transform_1, window_bounds = array<i64: 32, 32>}, {pipeline_mode = #tpu.pipeline_mode<synchronous>, transform_indices = @transform_2, window_bounds = array<i64: 8, 256>}, {pipeline_mode = #tpu.pipeline_mode<synchronous>, transform_indices = @transform_3, window_bounds = array<i64: 1, 256>}, {pipeline_mode = #tpu.pipeline_mode<synchronous>, transform_indices = @transform_4, window_bounds = array<i64: 256, 128>}, {pipeline_mode = #tpu.pipeline_mode<synchronous>, transform_indices = @transform_5, window_bounds = array<i64: 1, 128>}, {pipeline_mode = #tpu.pipeline_mode<synchronous>, transform_indices = @transform_6, window_bounds = array<i64: 256, 1>}, {pipeline_mode = #tpu.pipeline_mode<synchronous>, transform_indices = @transform_7, window_bounds = array<i64: 32, 1>}, {transform_indices = @transform_8, window_bounds = array<i64: 1, 1>}, {transform_indices = @transform_9, window_bounds = array<i64: 32, 1>}, {transform_indices = @transform_10, window_bounds = array<i64: 32, 128>}]} {
    %c0 = arith.constant 0 : index
    %c0_0 = arith.constant 0 : index
    %0 = vector.load %arg1[%c0, %c0_0] : memref<32x8xf32, #tpu.memory_space<vmem>>, vector<32x8xf32>
    %c0_1 = arith.constant 0 : index
    %c0_2 = arith.constant 0 : index
    %1 = vector.load %arg3[%c0_1, %c0_2] : memref<8x256xf32, #tpu.memory_space<vmem>>, vector<8x256xf32>
    %cst = arith.constant dense<0.000000e+00> : vector<32x256xf32>
    %2 = tpu.matmul %0, %1, %cst {dimension_numbers = #tpu.dot_dimension_numbers<[1], [0], [0], [1], [0, 0, 1, 1], [], []>} : vector<32x8xf32>, vector<8x256xf32>, vector<32x256xf32> -> vector<32x256xf32>
    %c0_3 = arith.constant 0 : index
    %c0_4 = arith.constant 0 : index
    %3 = vector.load %arg4[%c0_3, %c0_4] : memref<1x256xf32, #tpu.memory_space<vmem>>, vector<1x256xf32>
    %4 = vector.broadcast %3 : vector<1x256xf32> to vector<32x256xf32>
    %5 = arith.addf %2, %4 : vector<32x256xf32>
    %cst_5 = arith.constant 0.000000e+00 : f32
    %6 = vector.broadcast %cst_5 : f32 to vector<32x256xf32>
    %7 = arith.maximumf %5, %6 : vector<32x256xf32>
    %c0_6 = arith.constant 0 : index
    %c0_7 = arith.constant 0 : index
    %8 = vector.load %arg5[%c0_6, %c0_7] : memref<256x128xf32, #tpu.memory_space<vmem>>, vector<256x128xf32>
    %cst_8 = arith.constant dense<0.000000e+00> : vector<32x128xf32>
    %9 = tpu.matmul %7, %8, %cst_8 {dimension_numbers = #tpu.dot_dimension_numbers<[1], [0], [0], [1], [0, 0, 1, 1], [], []>} : vector<32x256xf32>, vector<256x128xf32>, vector<32x128xf32> -> vector<32x128xf32>
    %c0_9 = arith.constant 0 : index
    %c0_10 = arith.constant 0 : index
    %10 = vector.load %arg6[%c0_9, %c0_10] : memref<1x128xf32, #tpu.memory_space<vmem>>, vector<1x128xf32>
    %11 = vector.broadcast %10 : vector<1x128xf32> to vector<32x128xf32>
    %12 = arith.addf %9, %11 : vector<32x128xf32>
    %c0_11 = arith.constant 0 : index
    %c0_12 = arith.constant 0 : index
    %13 = vector.load %arg11[%c0_11, %c0_12] : memref<32x128xf32, #tpu.memory_space<vmem>>, vector<32x128xf32>
    tpu.vector_store %arg11[%c0_11, %c0_12], %12 {strides = array<i32>} : memref<32x128xf32, #tpu.memory_space<vmem>>, vector<32x128xf32>,
    %c0_13 = arith.constant 0 : index
    %c0_14 = arith.constant 0 : index
    %14 = vector.load %arg7[%c0_13, %c0_14] : memref<256x1xf32, #tpu.memory_space<vmem>>, vector<256x1xf32>
    %cst_15 = arith.constant dense<0.000000e+00> : vector<32x1xf32>
    %15 = tpu.matmul %7, %14, %cst_15 {dimension_numbers = #tpu.dot_dimension_numbers<[1], [0], [0], [1], [0, 0, 1, 1], [], []>} : vector<32x256xf32>, vector<256x1xf32>, vector<32x1xf32> -> vector<32x1xf32>
    %c0_16 = arith.constant 0 : index
    %c0_17 = arith.constant 0 : index
    %16 = vector.load %arg2[%c0_16, %c0_17] : memref<32x32xf32, #tpu.memory_space<vmem>>, vector<32x32xf32>
    %c0_18 = arith.constant 0 : index
    %c0_19 = arith.constant 0 : index
    %17 = vector.load %arg8[%c0_18, %c0_19] : memref<32x1xf32, #tpu.memory_space<vmem>>, vector<32x1xf32>
    %cst_20 = arith.constant dense<0.000000e+00> : vector<32x1xf32>
    %18 = tpu.matmul %16, %17, %cst_20 {dimension_numbers = #tpu.dot_dimension_numbers<[1], [0], [0], [1], [0, 0, 1, 1], [], []>} : vector<32x32xf32>, vector<32x1xf32>, vector<32x1xf32> -> vector<32x1xf32>
    %19 = arith.addf %15, %18 : vector<32x1xf32>
    %c0_21 = arith.constant 0 : index
    %c0_22 = arith.constant 0 : index
    %20 = memref.load %arg9[%c0_21, %c0_22] : memref<1x1xf32, #tpu.memory_space<smem>>
    %21 = vector.broadcast %20 : f32 to vector<32x1xf32>
    %22 = arith.addf %19, %21 : vector<32x1xf32>
    %c0_23 = arith.constant 0 : index
    %c0_24 = arith.constant 0 : index
    %23 = vector.load %arg10[%c0_23, %c0_24] : memref<32x1xf32, #tpu.memory_space<vmem>>, vector<32x1xf32>
    tpu.vector_store %arg10[%c0_23, %c0_24], %22 {strides = array<i32>} : memref<32x1xf32, #tpu.memory_space<vmem>>, vector<32x1xf32>,
    return
  }
  func.func @transform_0(%arg0: i32) -> (i32, i32) {
    %c0_i32 = arith.constant 0 : i32
    %c0_i32_0 = arith.constant 0 : i32
    return %arg0, %c0_i32 : i32, i32
  }
  func.func @transform_1(%arg0: i32) -> (i32, i32) {
    %c0_i32 = arith.constant 0 : i32
    %c0_i32_0 = arith.constant 0 : i32
    return %arg0, %c0_i32 : i32, i32
  }
  func.func @transform_2(%arg0: i32) -> (i32, i32) {
    %c0_i32 = arith.constant 0 : i32
    %c0_i32_0 = arith.constant 0 : i32
    %c0_i32_1 = arith.constant 0 : i32
    return %c0_i32, %c0_i32_0 : i32, i32
  }
  func.func @transform_3(%arg0: i32) -> (i32, i32) {
    %c0_i32 = arith.constant 0 : i32
    %c0_i32_0 = arith.constant 0 : i32
    %c0_i32_1 = arith.constant 0 : i32
    return %c0_i32, %c0_i32_0 : i32, i32
  }
  func.func @transform_4(%arg0: i32) -> (i32, i32) {
    %c0_i32 = arith.constant 0 : i32
    %c0_i32_0 = arith.constant 0 : i32
    %c0_i32_1 = arith.constant 0 : i32
    return %c0_i32, %c0_i32_0 : i32, i32
  }
  func.func @transform_5(%arg0: i32) -> (i32, i32) {
    %c0_i32 = arith.constant 0 : i32
    %c0_i32_0 = arith.constant 0 : i32
    %c0_i32_1 = arith.constant 0 : i32
    return %c0_i32, %c0_i32_0 : i32, i32
  }
  func.func @transform_6(%arg0: i32) -> (i32, i32) {
    %c0_i32 = arith.constant 0 : i32
    %c0_i32_0 = arith.constant 0 : i32
    %c0_i32_1 = arith.constant 0 : i32
    return %c0_i32, %c0_i32_0 : i32, i32
  }
  func.func @transform_7(%arg0: i32) -> (i32, i32) {
    %c0_i32 = arith.constant 0 : i32
    %c0_i32_0 = arith.constant 0 : i32
    %c0_i32_1 = arith.constant 0 : i32
    return %c0_i32, %c0_i32_0 : i32, i32
  }
  func.func @transform_8(%arg0: i32) -> (i32, i32) {
    %c0_i32 = arith.constant 0 : i32
    %c0_i32_0 = arith.constant 0 : i32
    %c0_i32_1 = arith.constant 0 : i32
    return %c0_i32, %c0_i32_0 : i32, i32
  }
  func.func @transform_9(%arg0: i32) -> (i32, i32) {
    %c0_i32 = arith.constant 0 : i32
    %c0_i32_0 = arith.constant 0 : i32
    return %arg0, %c0_i32 : i32, i32
  }
  func.func @transform_10(%arg0: i32) -> (i32, i32) {
    %c0_i32 = arith.constant 0 : i32
    %c0_i32_0 = arith.constant 0 : i32
    return %arg0, %c0_i32 : i32, i32
  }
}

</mosaic_0001>

<llo_original>
// kernel: tpu_custom_call.1
$region0: #{tpu_custom_call.1}
  #allocation0 [shape = 'u32[]', space=smem, size = 0x4, offset = 0x4, fixed_abs, tag = 'smem constant byte address 0x4 - core index']
  #allocation1 [shape = 'u32[144,128]{1,0:T(1,128)}', space=vmem, size = 0x12000, scoped, tag = 'internal scratch']
  #allocation2 [shape = 'f32[1,1]{1,0:T(1,128)S(6)}', space=smem, size = 0x200, scoped, tag = 'scoped memory for tpu_custom_call.1']
  %s0 = inlined_call_operand.vmem [shape: f32[128,8], index: 0, kind: input, shape index: {}]
  %s1 = inlined_call_operand.vmem [shape: f32[128,32], index: 1, kind: input, shape index: {}]
  %s2 = inlined_call_operand.vmem [shape: f32[8,256], index: 2, kind: input, shape index: {}]
  %s3 = inlined_call_operand.vmem [shape: f32[1,256], index: 3, kind: input, shape index: {}]
  %s4 = inlined_call_operand.vmem [shape: f32[256,128], index: 4, kind: input, shape index: {}]
  %s5 = inlined_call_operand.vmem [shape: f32[1,128], index: 5, kind: input, shape index: {}]
  %s6 = inlined_call_operand.vmem [shape: f32[256,1], index: 6, kind: input, shape index: {}]
  %s7 = inlined_call_operand.vmem [shape: f32[32,1], index: 7, kind: input, shape index: {}]
  %s8 = inlined_call_operand.<no memory space> [shape: f32[1,1], index: 8, kind: input, shape index: {}]
  %s9 = inlined_call_operand.vmem [shape: f32[128,1], index: 9, kind: output, shape index: {0}]
  %s10 = inlined_call_operand.hbm [shape: f32[128,128], index: 10, kind: output, shape index: {1}]
  %11 = xla_tuple %s9, %s10
  %s12 = sld [smem:[#allocation0]]
  $region77: #{tpu_custom_call.1} parent=0
    _
  %s14 = ssub.s32 1, %s12
  %s15 = scalar_select 0, %s14, %s12
  %16 = sst [smem:[#allocation2]] %s8
  $region1: #{tpu_custom_call.1} parent=0
    #allocation3 [shape = 'u8[32768]{0}', space=vmem, size = 0x8000, scoped, tag = 'output window, operand 1']
    #allocation4 [shape = 's32[2]{0}', space=sflag, size = 0x8, scoped, tag = 'scoped memory for tpu_custom_call.1']
    %17 = vsyncpa [#allocation4], 0
    %s18 = scalar_lea.sflag [#allocation4], 1
    %19 = vsyncpa %s18, 0
    loop: start=0, step=1, limit=6
    $region2: #{tpu_custom_call.1} parent=1 // loop_pre_header
      _
    $region3: #{tpu_custom_call.1} parent=1 // loop_header
      %s21 = sphi 0, %s25
      %p22 = scmp.ge.s32.totalorder %s21, 6
      %s31 = sphi 0, %s33
      %s34 = sphi 0, %s31
      %s35 = sphi 0, %s34
      %s51 = sphi 0, %s35
      %s57 = sphi 0, %s59
      %s60 = sphi 0, %s57
      %s61 = sphi 0, %s60
      %s77 = sphi 0, %s61
      %s81 = sphi 0, %s81
      %s83 = sphi 0, %s81
      %s84 = sphi 0, %s83
      %s98 = sphi 0, %s84
      %s102 = sphi 0, %s102
      %s104 = sphi 0, %s102
      %s105 = sphi 0, %s104
      %s119 = sphi 0, %s105
      %s123 = sphi 0, %s123
      %s125 = sphi 0, %s123
      %s126 = sphi 0, %s125
      %s140 = sphi 0, %s126
      %s144 = sphi 0, %s144
      %s146 = sphi 0, %s144
      %s147 = sphi 0, %s146
      %s161 = sphi 0, %s147
      %s165 = sphi 0, %s165
      %s167 = sphi 0, %s165
      %s168 = sphi 0, %s167
      %s182 = sphi 0, %s168
      %s186 = sphi 0, %s186
      %s188 = sphi 0, %s186
      %s189 = sphi 0, %s188
      %s203 = sphi 0, %s189
      %s207 = sphi 0, %s207
      %s209 = sphi 0, %s207
      %s210 = sphi 0, %s209
      %s224 = sphi 0, %s210
      %s230 = sphi 0, %s232
      %s233 = sphi 0, %s230
      %s234 = sphi 0, %s233
      %s250 = sphi 0, %s234
      %s256 = sphi 0, %s258
      %s259 = sphi 0, %s256
      %s260 = sphi 0, %s259
      %s276 = sphi 0, %s260
    $region4: #{tpu_custom_call.1} parent=1 // loop_header_branch
      %24 = sbr.rel (%p22) target = $region8
    $region5: #{tpu_custom_call.1} parent=1 // loop_body
      %s26 = ssub.s32 %s21, 1
      %s27 = ssub.s32 %s21, 2
      %s28 = sadd.s32 %s21, 1
      %s29 = ssub.s32 %s21, %s28
      %p30 = scmp.eq.s32.totalorder %s29, 0
      %s32 = sadd.s32 %s31, 1
      %s33 = scalar_select %p30, %s31, %s32
      %p36 = pneg %p30
      %p37 = scmp.eq.s32.totalorder %s21, 3
      %p38 = por %p36, %p37
      %p39 = scmp.ne.s32.totalorder %s31, %s34
      %p40 = scmp.eq.s32.totalorder %s21, 0
      %p41 = por %p39, %p40
      %p42 = scmp.ne.s32.totalorder %s31, %s34
      %p43 = scmp.eq.s32.totalorder %s26, 3
      %p44 = por %p42, %p43
      %p45 = scmp.ne.s32.totalorder %s34, %s35
      %p46 = scmp.eq.s32.totalorder %s26, 0
      %p47 = por %p45, %p46
      %p48 = scmp.ne.s32.totalorder %s34, %s35
      %p49 = scmp.eq.s32.totalorder %s27, 3
      %p50 = por %p48, %p49
      %p52 = scmp.ne.s32.totalorder %s35, %s51
      %p53 = scmp.eq.s32.totalorder %s27, 0
      %p54 = por %p52, %p53
      %s55 = ssub.s32 %s21, %s28
      %p56 = scmp.eq.s32.totalorder %s55, 0
      %s58 = sadd.s32 %s57, 1
      %s59 = scalar_select %p56, %s57, %s58
      %p62 = pneg %p56
      %p63 = scmp.eq.s32.totalorder %s21, 3
      %p64 = por %p62, %p63
      %p65 = scmp.ne.s32.totalorder %s57, %s60
      %p66 = scmp.eq.s32.totalorder %s21, 0
      %p67 = por %p65, %p66
      %p68 = scmp.ne.s32.totalorder %s57, %s60
      %p69 = scmp.eq.s32.totalorder %s26, 3
      %p70 = por %p68, %p69
      %p71 = scmp.ne.s32.totalorder %s60, %s61
      %p72 = scmp.eq.s32.totalorder %s26, 0
      %p73 = por %p71, %p72
      %p74 = scmp.ne.s32.totalorder %s60, %s61
      %p75 = scmp.eq.s32.totalorder %s27, 3
      %p76 = por %p74, %p75
      %p78 = scmp.ne.s32.totalorder %s61, %s77
      %p79 = scmp.eq.s32.totalorder %s27, 0
      %p80 = por %p78, %p79
      %s82 = sadd.s32 %s81, 1
      %p85 = scmp.eq.s32.totalorder %s21, 3
      %p86 = scmp.ne.s32.totalorder %s81, %s83
      %p87 = scmp.eq.s32.totalorder %s21, 0
      %p88 = por %p86, %p87
      %p89 = scmp.ne.s32.totalorder %s81, %s83
      %p90 = scmp.eq.s32.totalorder %s26, 3
      %p91 = por %p89, %p90
      %p92 = scmp.ne.s32.totalorder %s83, %s84
      %p93 = scmp.eq.s32.totalorder %s26, 0
      %p94 = por %p92, %p93
      %p95 = scmp.ne.s32.totalorder %s83, %s84
      %p96 = scmp.eq.s32.totalorder %s27, 3
      %p97 = por %p95, %p96
      %p99 = scmp.ne.s32.totalorder %s84, %s98
      %p100 = scmp.eq.s32.totalorder %s27, 0
      %p101 = por %p99, %p100
      %s103 = sadd.s32 %s102, 1
      %p106 = scmp.eq.s32.totalorder %s21, 3
      %p107 = scmp.ne.s32.totalorder %s102, %s104
      %p108 = scmp.eq.s32.totalorder %s21, 0
      %p109 = por %p107, %p108
      %p110 = scmp.ne.s32.totalorder %s102, %s104
      %p111 = scmp.eq.s32.totalorder %s26, 3
      %p112 = por %p110, %p111
      %p113 = scmp.ne.s32.totalorder %s104, %s105
      %p114 = scmp.eq.s32.totalorder %s26, 0
      %p115 = por %p113, %p114
      %p116 = scmp.ne.s32.totalorder %s104, %s105
      %p117 = scmp.eq.s32.totalorder %s27, 3
      %p118 = por %p116, %p117
      %p120 = scmp.ne.s32.totalorder %s105, %s119
      %p121 = scmp.eq.s32.totalorder %s27, 0
      %p122 = por %p120, %p121
      %s124 = sadd.s32 %s123, 1
      %p127 = scmp.eq.s32.totalorder %s21, 3
      %p128 = scmp.ne.s32.totalorder %s123, %s125
      %p129 = scmp.eq.s32.totalorder %s21, 0
      %p130 = por %p128, %p129
      %p131 = scmp.ne.s32.totalorder %s123, %s125
      %p132 = scmp.eq.s32.totalorder %s26, 3
      %p133 = por %p131, %p132
      %p134 = scmp.ne.s32.totalorder %s125, %s126
      %p135 = scmp.eq.s32.totalorder %s26, 0
      %p136 = por %p134, %p135
      %p137 = scmp.ne.s32.totalorder %s125, %s126
      %p138 = scmp.eq.s32.totalorder %s27, 3
      %p139 = por %p137, %p138
      %p141 = scmp.ne.s32.totalorder %s126, %s140
      %p142 = scmp.eq.s32.totalorder %s27, 0
      %p143 = por %p141, %p142
      %s145 = sadd.s32 %s144, 1
      %p148 = scmp.eq.s32.totalorder %s21, 3
      %p149 = scmp.ne.s32.totalorder %s144, %s146
      %p150 = scmp.eq.s32.totalorder %s21, 0
      %p151 = por %p149, %p150
      %p152 = scmp.ne.s32.totalorder %s144, %s146
      %p153 = scmp.eq.s32.totalorder %s26, 3
      %p154 = por %p152, %p153
      %p155 = scmp.ne.s32.totalorder %s146, %s147
      %p156 = scmp.eq.s32.totalorder %s26, 0
      %p157 = por %p155, %p156
      %p158 = scmp.ne.s32.totalorder %s146, %s147
      %p159 = scmp.eq.s32.totalorder %s27, 3
      %p160 = por %p158, %p159
      %p162 = scmp.ne.s32.totalorder %s147, %s161
      %p163 = scmp.eq.s32.totalorder %s27, 0
      %p164 = por %p162, %p163
      %s166 = sadd.s32 %s165, 1
      %p169 = scmp.eq.s32.totalorder %s21, 3
      %p170 = scmp.ne.s32.totalorder %s165, %s167
      %p171 = scmp.eq.s32.totalorder %s21, 0
      %p172 = por %p170, %p171
      %p173 = scmp.ne.s32.totalorder %s165, %s167
      %p174 = scmp.eq.s32.totalorder %s26, 3
      %p175 = por %p173, %p174
      %p176 = scmp.ne.s32.totalorder %s167, %s168
      %p177 = scmp.eq.s32.totalorder %s26, 0
      %p178 = por %p176, %p177
      %p179 = scmp.ne.s32.totalorder %s167, %s168
      %p180 = scmp.eq.s32.totalorder %s27, 3
      %p181 = por %p179, %p180
      %p183 = scmp.ne.s32.totalorder %s168, %s182
      %p184 = scmp.eq.s32.totalorder %s27, 0
      %p185 = por %p183, %p184
      %s187 = sadd.s32 %s186, 1
      %p190 = scmp.eq.s32.totalorder %s21, 3
      %p191 = scmp.ne.s32.totalorder %s186, %s188
      %p192 = scmp.eq.s32.totalorder %s21, 0
      %p193 = por %p191, %p192
      %p194 = scmp.ne.s32.totalorder %s186, %s188
      %p195 = scmp.eq.s32.totalorder %s26, 3
      %p196 = por %p194, %p195
      %p197 = scmp.ne.s32.totalorder %s188, %s189
      %p198 = scmp.eq.s32.totalorder %s26, 0
      %p199 = por %p197, %p198
      %p200 = scmp.ne.s32.totalorder %s188, %s189
      %p201 = scmp.eq.s32.totalorder %s27, 3
      %p202 = por %p200, %p201
      %p204 = scmp.ne.s32.totalorder %s189, %s203
      %p205 = scmp.eq.s32.totalorder %s27, 0
      %p206 = por %p204, %p205
      %s208 = sadd.s32 %s207, 1
      %p211 = scmp.eq.s32.totalorder %s21, 3
      %p212 = scmp.ne.s32.totalorder %s207, %s209
      %p213 = scmp.eq.s32.totalorder %s21, 0
      %p214 = por %p212, %p213
      %p215 = scmp.ne.s32.totalorder %s207, %s209
      %p216 = scmp.eq.s32.totalorder %s26, 3
      %p217 = por %p215, %p216
      %p218 = scmp.ne.s32.totalorder %s209, %s210
      %p219 = scmp.eq.s32.totalorder %s26, 0
      %p220 = por %p218, %p219
      %p221 = scmp.ne.s32.totalorder %s209, %s210
      %p222 = scmp.eq.s32.totalorder %s27, 3
      %p223 = por %p221, %p222
      %p225 = scmp.ne.s32.totalorder %s210, %s224
      %p226 = scmp.eq.s32.totalorder %s27, 0
      %p227 = por %p225, %p226
      %s228 = ssub.s32 %s21, %s28
      %p229 = scmp.eq.s32.totalorder %s228, 0
      %s231 = sadd.s32 %s230, 1
      %s232 = scalar_select %p229, %s230, %s231
      %p235 = pneg %p229
      %p236 = scmp.eq.s32.totalorder %s21, 3
      %p237 = por %p235, %p236
      %p238 = scmp.ne.s32.totalorder %s230, %s233
      %p239 = scmp.eq.s32.totalorder %s21, 0
      %p240 = por %p238, %p239
      %p241 = scmp.ne.s32.totalorder %s230, %s233
      %p242 = scmp.eq.s32.totalorder %s26, 3
      %p243 = por %p241, %p242
      %p244 = scmp.ne.s32.totalorder %s233, %s234
      %p245 = scmp.eq.s32.totalorder %s26, 0
      %p246 = por %p244, %p245
      %p247 = scmp.ne.s32.totalorder %s233, %s234
      %p248 = scmp.eq.s32.totalorder %s27, 3
      %p249 = por %p247, %p248
      %p251 = scmp.ne.s32.totalorder %s234, %s250
      %p252 = scmp.eq.s32.totalorder %s27, 0
      %p253 = por %p251, %p252
      %s254 = ssub.s32 %s21, %s28
      %p255 = scmp.eq.s32.totalorder %s254, 0
      %s257 = sadd.s32 %s256, 1
      %s258 = scalar_select %p255, %s256, %s257
      %p261 = pneg %p255
      %p262 = scmp.eq.s32.totalorder %s21, 3
      %p263 = por %p261, %p262
      %p264 = scmp.ne.s32.totalorder %s256, %s259
      %p265 = scmp.eq.s32.totalorder %s21, 0
      %p266 = por %p264, %p265
      %p267 = scmp.ne.s32.totalorder %s256, %s259
      %p268 = scmp.eq.s32.totalorder %s26, 3
      %p269 = por %p267, %p268
      %p270 = scmp.ne.s32.totalorder %s259, %s260
      %p271 = scmp.eq.s32.totalorder %s26, 0
      %p272 = por %p270, %p271
      %p273 = scmp.ne.s32.totalorder %s259, %s260
      %p274 = scmp.eq.s32.totalorder %s27, 3
      %p275 = por %p273, %p274
      %p277 = scmp.ne.s32.totalorder %s260, %s276
      %p278 = scmp.eq.s32.totalorder %s27, 0
      %p279 = por %p277, %p278
      %p280 = scmp.le.s32.totalorder 1, %s21
      %p281 = scmp.lt.s32.totalorder %s21, 5
      %p282 = pnand %p280, %p281
      %p283 = pneg %p282
      // Predicated region
      $region9: #{tpu_custom_call.1} parent=5 // pred_check
        _
      $region10: #{tpu_custom_call.1} parent=5 // pred_check_branch
        %285 = sbr.rel (%p282) target = $region12
      $region11: #{tpu_custom_call.1} parent=5 // pred_region
        %s286 = ssub.s32 %s21, 1
        // Predicated region
        $region13: #{tpu_custom_call.1} parent=11 // pred_check
          %p287 = pneg %p94
        $region14: #{tpu_custom_call.1} parent=11 // pred_check_branch
          %289 = sbr.rel (%p287) target = $region16
        $region15: #{tpu_custom_call.1} parent=11 // pred_region
          _
        $region16: #{tpu_custom_call.1} parent=11 // pred_fallthru
          _
        // Predicated region
        $region17: #{tpu_custom_call.1} parent=11 // pred_check
          %p290 = pneg %p115
        $region18: #{tpu_custom_call.1} parent=11 // pred_check_branch
          %292 = sbr.rel (%p290) target = $region20
        $region19: #{tpu_custom_call.1} parent=11 // pred_region
          _
        $region20: #{tpu_custom_call.1} parent=11 // pred_fallthru
          _
        // Predicated region
        $region21: #{tpu_custom_call.1} parent=11 // pred_check
          %p293 = pneg %p136
        $region22: #{tpu_custom_call.1} parent=11 // pred_check_branch
          %295 = sbr.rel (%p293) target = $region24
        $region23: #{tpu_custom_call.1} parent=11 // pred_region
          _
        $region24: #{tpu_custom_call.1} parent=11 // pred_fallthru
          _
        // Predicated region
        $region25: #{tpu_custom_call.1} parent=11 // pred_check
          %p296 = pneg %p157
        $region26: #{tpu_custom_call.1} parent=11 // pred_check_branch
          %298 = sbr.rel (%p296) target = $region28
        $region27: #{tpu_custom_call.1} parent=11 // pred_region
          _
        $region28: #{tpu_custom_call.1} parent=11 // pred_fallthru
          _
        // Predicated region
        $region29: #{tpu_custom_call.1} parent=11 // pred_check
          %p299 = pneg %p178
        $region30: #{tpu_custom_call.1} parent=11 // pred_check_branch
          %301 = sbr.rel (%p299) target = $region32
        $region31: #{tpu_custom_call.1} parent=11 // pred_region
          _
        $region32: #{tpu_custom_call.1} parent=11 // pred_fallthru
          _
        // Predicated region
        $region33: #{tpu_custom_call.1} parent=11 // pred_check
          %p302 = pneg %p199
        $region34: #{tpu_custom_call.1} parent=11 // pred_check_branch
          %304 = sbr.rel (%p302) target = $region36
        $region35: #{tpu_custom_call.1} parent=11 // pred_region
          _
        $region36: #{tpu_custom_call.1} parent=11 // pred_fallthru
          _
        // Predicated region
        $region37: #{tpu_custom_call.1} parent=11 // pred_check
          %p305 = pneg %p220
        $region38: #{tpu_custom_call.1} parent=11 // pred_check_branch
          %307 = sbr.rel (%p305) target = $region40
        $region39: #{tpu_custom_call.1} parent=11 // pred_region
          _
        $region40: #{tpu_custom_call.1} parent=11 // pred_fallthru
          _
      $region12: #{tpu_custom_call.1} parent=5 // pred_fallthru
        _
      %p308 = scmp.lt.s32.totalorder %s21, 4
      // Predicated region
      $region41: #{tpu_custom_call.1} parent=5 // pred_check
        %p309 = pneg %p308
      $region42: #{tpu_custom_call.1} parent=5 // pred_check_branch
        %311 = sbr.rel (%p309) target = $region44
      $region43: #{tpu_custom_call.1} parent=5 // pred_region
        // Predicated region
        $region45: #{tpu_custom_call.1} parent=43 // pred_check
          %p312 = pneg %p41
        $region46: #{tpu_custom_call.1} parent=43 // pred_check_branch
          %314 = sbr.rel (%p312) target = $region48
        $region47: #{tpu_custom_call.1} parent=43 // pred_region
          %s315 = smul.u32 4, %s21
          %p316 = scmp.lt.s32.totalorder %s315, 15
          %s317 = scalar_select %p316, %s315, 15
          %s318 = smul.addr %s317, 8
          %s319 = scalar_lea.vmem %s0, %s318
          %s320 = smul.u32 4, %s21
        $region48: #{tpu_custom_call.1} parent=43 // pred_fallthru
          _
        // Predicated region
        $region49: #{tpu_custom_call.1} parent=43 // pred_check
          %p321 = pneg %p67
        $region50: #{tpu_custom_call.1} parent=43 // pred_check_branch
          %323 = sbr.rel (%p321) target = $region52
        $region51: #{tpu_custom_call.1} parent=43 // pred_region
          %s324 = smul.u32 4, %s21
          %p325 = scmp.lt.s32.totalorder %s324, 15
          %s326 = scalar_select %p325, %s324, 15
          %s327 = smul.addr %s326, 8
          %s328 = scalar_lea.vmem %s1, %s327
          %s329 = smul.u32 4, %s21
        $region52: #{tpu_custom_call.1} parent=43 // pred_fallthru
          _
      $region44: #{tpu_custom_call.1} parent=5 // pred_fallthru
        _
      %p330 = scmp.le.s32.totalorder 1, %s21
      %p331 = scmp.lt.s32.totalorder %s21, 5
      %p332 = pnand %p330, %p331
      %p333 = pneg %p332
      // Predicated region
      $region53: #{tpu_custom_call.1} parent=5 // pred_check
        _
      $region54: #{tpu_custom_call.1} parent=5 // pred_check_branch
        %335 = sbr.rel (%p332) target = $region56
      $region55: #{tpu_custom_call.1} parent=5 // pred_region
        %s336 = ssub.s32 %s21, 1
        %s337 = smul.u32 4, %s26
        %p338 = scmp.lt.s32.totalorder %s337, 15
        %s339 = scalar_select %p338, %s337, 15
        %s340 = smul.addr %s339, 8
        %s341 = scalar_lea.vmem %s0, %s340
        %p342 = pneg %p47
        %p343 = pneg %p44
        %s344 = smul.u32 4, %s26
        %p345 = scmp.lt.s32.totalorder %s344, 15
        %s346 = scalar_select %p345, %s344, 15
        %s347 = smul.addr %s346, 8
        %s348 = scalar_lea.vmem %s1, %s347
        %p349 = pneg %p73
        %p350 = pneg %p70
        %p351 = pneg %p94
        %p352 = pneg %p91
        %p353 = pneg %p115
        %p354 = pneg %p112
        %p355 = pneg %p136
        %p356 = pneg %p133
        %p357 = pneg %p157
        %p358 = pneg %p154
        %p359 = pneg %p178
        %p360 = pneg %p175
        %p361 = pneg %p199
        %p362 = pneg %p196
        %p363 = pneg %p220
        %p364 = pneg %p217
        %p365 = pneg %p246
        %p366 = pneg %p243
        %s367 = smul.u32 4, %s26
        %p368 = scmp.lt.s32.totalorder %s367, 15
        %s369 = scalar_select %p368, %s367, 15
        %s370 = smul.addr %s369, 8
        %s371 = scalar_lea.vmem %s9, %s370
        %p372 = pneg %p272
        %p373 = pneg %p269
        %s374 = sand.u32 %s259, 1
        %s375 = scalar_lea.sflag [#allocation4], %s374
        %s376 = sand.u32 %s259, 1
        %s377 = smul.addr %s376, 32
        %s378 = scalar_lea.vmem [#allocation3], %s377
        %s379 = smul.u32 4, %s26
        %p380 = scmp.lt.s32.totalorder %s379, 15
        %s381 = scalar_select %p380, %s379, 15
        %s382 = smul.addr %s381, 8
        %s383 = scalar_lea.vmem %s0, %s382
        %s384 = smul.u32 4, %s26
        %s385 = smul.u32 4, %s26
        %p386 = scmp.lt.s32.totalorder %s385, 15
        %s387 = scalar_select %p386, %s385, 15
        %s388 = smul.addr %s387, 8
        %s389 = scalar_lea.vmem %s1, %s388
        %s390 = smul.u32 4, %s26
        %s391 = smul.u32 4, %s26
        %p392 = scmp.lt.s32.totalorder %s391, 15
        %s393 = scalar_select %p392, %s391, 15
        %s394 = smul.addr %s393, 8
        %s395 = scalar_lea.vmem %s9, %s394
        %s396 = smul.u32 4, %s26
        %s397 = smul.u32 4, %s26
        %v398 = vld [vmem:[%s383] sm:$0xff]
        %v399 = vld [vmem:[%s383 + $0x8] sm:$0xff]
        %v400 = vld [vmem:[%s383 + $0x10] sm:$0xff]
        %v401 = vld [vmem:[%s383 + $0x18] sm:$0xff]
        %v402 = vld [vmem:[%s2] sm:$0xff]
        %v403 = vld [vmem:[%s2 + $0x8] sm:$0xff]
        %v404 = vld [vmem:[%s3] sm:$0x3]
        %v406 = vlaneseq
        %v407 = vshrl.u32 %v406, 7
        %v408 = vsub.s32 0, %v407
        %v409 = vrot.slane %v404, %v408
        %v410 = vlaneseq
        %v411 = vshrl.u32 %v410, 7
        %v412 = vsub.s32 1, %v411
        %v413 = vrot.slane %v404, %v412
        %vm416 = vcmask 64512
        %v418 = vsel %vm416, %v398, 0
        %v421 = vsel %vm416, %v399, 0
        %v424 = vsel %vm416, %v400, 0
        %v427 = vsel %vm416, %v401, 0
        %429 = vmatprep.subr.mxu0 %v403
        %430 = vmatpush1.msra.mxu0 %v402
        %431 = vmatprep.subr.mxu0 0.0
        %432 = vmatpush1.msra.mxu0 0.0
        %433 = vmatprep.subr.mxu0 0.0
        %434 = vmatpush1.msra.mxu0 0.0
        %435 = vmatprep.subr.mxu0 0.0
        %436 = vmatpush1.msra.mxu0 0.0
        %437 = vmatprep.subr.mxu0 0.0
        %438 = vmatpush1.msra.mxu0 0.0
        %439 = vmatprep.subr.mxu0 0.0
        %440 = vmatpush1.msra.mxu0 0.0
        %441 = vmatprep.subr.mxu0 0.0
        %442 = vmatpush1.msra.mxu0 0.0
        %443 = vmatprep.subr.mxu0 0.0
        %444 = vmatpush1.msra.mxu0 0.0
        %445 = vmatprep.subr.mxu0 0.0
        %446 = vmatpush1.msra.mxu0 0.0
        %447 = vmatprep.subr.mxu0 0.0
        %448 = vmatpush1.msra.mxu0 0.0
        %449 = vmatprep.subr.mxu0 0.0
        %450 = vmatpush1.msra.mxu0 0.0
        %451 = vmatprep.subr.mxu0 0.0
        %452 = vmatpush1.msra.mxu0 0.0
        %453 = vmatprep.subr.mxu0 0.0
        %454 = vmatpush1.msra.mxu0 0.0
        %455 = vmatprep.subr.mxu0 0.0
        %456 = vmatpush1.msra.mxu0 0.0
        %457 = vmatprep.subr.mxu0 0.0
        %458 = vmatpush1.msra.mxu0 0.0
        %459 = vmatprep.subr.mxu0 0.0
        %460 = vmatpush1.msra.mxu0 0.0
        %461 = vmatprep.subr.mxu0 0.0
        %462 = vmatpush1.msra.mxu0 0.0
        %463 = vmatprep.subr.mxu0 0.0
        %464 = vmatpush1.msra.mxu0 0.0
        %465 = vmatprep.subr.mxu0 0.0
        %466 = vmatpush1.msra.mxu0 0.0
        %467 = vmatprep.subr.mxu0 0.0
        %468 = vmatpush1.msra.mxu0 0.0
        %469 = vmatprep.subr.mxu0 0.0
        %470 = vmatpush1.msra.mxu0 0.0
        %471 = vmatprep.subr.mxu0 0.0
        %472 = vmatpush1.msra.mxu0 0.0
        %473 = vmatprep.subr.mxu0 0.0
        %474 = vmatpush1.msra.mxu0 0.0
        %475 = vmatprep.subr.mxu0 0.0
        %476 = vmatpush1.msra.mxu0 0.0
        %477 = vmatprep.subr.mxu0 0.0
        %478 = vmatpush1.msra.mxu0 0.0
        %479 = vmatprep.subr.mxu0 0.0
        %480 = vmatpush1.msra.mxu0 0.0
        %481 = vmatprep.subr.mxu0 0.0
        %482 = vmatpush1.msra.mxu0 0.0
        %483 = vmatprep.subr.mxu0 0.0
        %484 = vmatpush1.msra.mxu0 0.0
        %485 = vmatprep.subr.mxu0 0.0
        %486 = vmatpush1.msra.mxu0 0.0
        %487 = vmatprep.subr.mxu0 0.0
        %488 = vmatpush1.msra.mxu0 0.0
        %489 = vmatprep.subr.mxu0 0.0
        %490 = vmatpush1.msra.mxu0 0.0
        %491 = vmatprep.subr.mxu0 0.0
        %492 = vmatpush1.msra.mxu0 0.0
        %493 = vmatprep.mubr.f32.mxu0 0.0
        %494 = vmatmul.mubr.f32.gmra.mrb[0].mxu0 %v418
        %v495 = vpop.f32.mrb[0].mxu0
        %v496 = vadd.f32 %v409, %v495
        %v497 = vpop.f32.mrb[0].mxu0
        %v498 = vadd.f32 %v413, %v497
        %499 = vmatprep.mubr.f32.mxu0 0.0
        %500 = vmatmul.mubr.f32.gmra.mrb[0].mxu0 %v421
        %v501 = vpop.f32.mrb[0].mxu0
        %v502 = vadd.f32 %v409, %v501
        %v503 = vpop.f32.mrb[0].mxu0
        %v504 = vadd.f32 %v413, %v503
        %505 = vmatprep.mubr.f32.mxu0 0.0
        %506 = vmatmul.mubr.f32.gmra.mrb[0].mxu0 %v424
        %v507 = vpop.f32.mrb[0].mxu0
        %v508 = vadd.f32 %v409, %v507
        %v509 = vpop.f32.mrb[0].mxu0
        %v510 = vadd.f32 %v413, %v509
        %511 = vmatprep.mubr.f32.mxu0 0.0
        %512 = vmatmul.mubr.f32.gmra.mrb[0].mxu0 %v427
        %v513 = vpop.f32.mrb[0].mxu0
        %v514 = vadd.f32 %v409, %v513
        %v515 = vpop.f32.mrb[0].mxu0
        %v516 = vadd.f32 %v413, %v515
        %517 = vdwg.mxu0
        %v518 = vmax.f32 %v496, 0.0
        %v519 = vmax.f32 %v498, 0.0
        %v520 = vmax.f32 %v502, 0.0
        %v521 = vmax.f32 %v504, 0.0
        %v522 = vmax.f32 %v508, 0.0
        %v523 = vmax.f32 %v510, 0.0
        %v524 = vmax.f32 %v514, 0.0
        %v525 = vmax.f32 %v516, 0.0
        %v526 = vld [vmem:[%s4] sm:$0xff]
        %v527 = vld [vmem:[%s4 + $0x8] sm:$0xff]
        %v528 = vld [vmem:[%s4 + $0x10] sm:$0xff]
        %v529 = vld [vmem:[%s4 + $0x18] sm:$0xff]
        %v530 = vld [vmem:[%s4 + $0x20] sm:$0xff]
        %v531 = vld [vmem:[%s4 + $0x28] sm:$0xff]
        %v532 = vld [vmem:[%s4 + $0x30] sm:$0xff]
        %v533 = vld [vmem:[%s4 + $0x38] sm:$0xff]
        %v534 = vld [vmem:[%s4 + $0x40] sm:$0xff]
        %v535 = vld [vmem:[%s4 + $0x48] sm:$0xff]
        %v536 = vld [vmem:[%s4 + $0x50] sm:$0xff]
        %v537 = vld [vmem:[%s4 + $0x58] sm:$0xff]
        %v538 = vld [vmem:[%s4 + $0x60] sm:$0xff]
        %v539 = vld [vmem:[%s4 + $0x68] sm:$0xff]
        %v540 = vld [vmem:[%s4 + $0x70] sm:$0xff]
        %v541 = vld [vmem:[%s4 + $0x78] sm:$0xff]
        %v542 = vld [vmem:[%s4 + $0x80] sm:$0xff]
        %v543 = vld [vmem:[%s4 + $0x88] sm:$0xff]
        %v544 = vld [vmem:[%s4 + $0x90] sm:$0xff]
        %v545 = vld [vmem:[%s4 + $0x98] sm:$0xff]
        %v546 = vld [vmem:[%s4 + $0xa0] sm:$0xff]
        %v547 = vld [vmem:[%s4 + $0xa8] sm:$0xff]
        %v548 = vld [vmem:[%s4 + $0xb0] sm:$0xff]
        %v549 = vld [vmem:[%s4 + $0xb8] sm:$0xff]
        %v550 = vld [vmem:[%s4 + $0xc0] sm:$0xff]
        %v551 = vld [vmem:[%s4 + $0xc8] sm:$0xff]
        %v552 = vld [vmem:[%s4 + $0xd0] sm:$0xff]
        %v553 = vld [vmem:[%s4 + $0xd8] sm:$0xff]
        %v554 = vld [vmem:[%s4 + $0xe0] sm:$0xff]
        %v555 = vld [vmem:[%s4 + $0xe8] sm:$0xff]
        %v556 = vld [vmem:[%s4 + $0xf0] sm:$0xff]
        %v557 = vld [vmem:[%s4 + $0xf8] sm:$0xff]
        %v558 = vld [vmem:[%s5] sm:$0x1]
        %v560 = vlaneseq
        %v561 = vshrl.u32 %v560, 7
        %v562 = vsub.s32 0, %v561
        %v563 = vrot.slane %v558, %v562
        %565 = vmatprep.subr.mxu0 0.0
        %566 = vmatpush1.msra.mxu0 %v526
        %567 = vmatprep.subr.mxu0 0.0
        %568 = vmatpush1.msra.mxu0 %v527
        %569 = vmatprep.subr.mxu0 0.0
        %570 = vmatpush1.msra.mxu0 %v528
        %571 = vmatprep.subr.mxu0 0.0
        %572 = vmatpush1.msra.mxu0 %v529
        %573 = vmatprep.subr.mxu0 0.0
        %574 = vmatpush1.msra.mxu0 %v530
        %575 = vmatprep.subr.mxu0 0.0
        %576 = vmatpush1.msra.mxu0 %v531
        %577 = vmatprep.subr.mxu0 0.0
        %578 = vmatpush1.msra.mxu0 %v532
        %579 = vmatprep.subr.mxu0 0.0
        %580 = vmatpush1.msra.mxu0 %v533
        %581 = vmatprep.subr.mxu0 0.0
        %582 = vmatpush1.msra.mxu0 %v534
        %583 = vmatprep.subr.mxu0 0.0
        %584 = vmatpush1.msra.mxu0 %v535
        %585 = vmatprep.subr.mxu0 0.0
        %586 = vmatpush1.msra.mxu0 %v536
        %587 = vmatprep.subr.mxu0 0.0
        %588 = vmatpush1.msra.mxu0 %v537
        %589 = vmatprep.subr.mxu0 0.0
        %590 = vmatpush1.msra.mxu0 %v538
        %591 = vmatprep.subr.mxu0 0.0
        %592 = vmatpush1.msra.mxu0 %v539
        %593 = vmatprep.subr.mxu0 0.0
        %594 = vmatpush1.msra.mxu0 %v540
        %595 = vmatprep.subr.mxu0 0.0
        %596 = vmatpush1.msra.mxu0 %v541
        %597 = vmatprep.subr.mxu0 0.0
        %598 = vmatpush1.msra.mxu0 %v542
        %599 = vmatprep.subr.mxu0 0.0
        %600 = vmatpush1.msra.mxu0 %v543
        %601 = vmatprep.subr.mxu0 0.0
        %602 = vmatpush1.msra.mxu0 %v544
        %603 = vmatprep.subr.mxu0 0.0
        %604 = vmatpush1.msra.mxu0 %v545
        %605 = vmatprep.subr.mxu0 0.0
        %606 = vmatpush1.msra.mxu0 %v546
        %607 = vmatprep.subr.mxu0 0.0
        %608 = vmatpush1.msra.mxu0 %v547
        %609 = vmatprep.subr.mxu0 0.0
        %610 = vmatpush1.msra.mxu0 %v548
        %611 = vmatprep.subr.mxu0 0.0
        %612 = vmatpush1.msra.mxu0 %v549
        %613 = vmatprep.subr.mxu0 0.0
        %614 = vmatpush1.msra.mxu0 %v550
        %615 = vmatprep.subr.mxu0 0.0
        %616 = vmatpush1.msra.mxu0 %v551
        %617 = vmatprep.subr.mxu0 0.0
        %618 = vmatpush1.msra.mxu0 %v552
        %619 = vmatprep.subr.mxu0 0.0
        %620 = vmatpush1.msra.mxu0 %v553
        %621 = vmatprep.subr.mxu0 0.0
        %622 = vmatpush1.msra.mxu0 %v554
        %623 = vmatprep.subr.mxu0 0.0
        %624 = vmatpush1.msra.mxu0 %v555
        %625 = vmatprep.subr.mxu0 0.0
        %626 = vmatpush1.msra.mxu0 %v556
        %627 = vmatprep.subr.mxu0 0.0
        %628 = vmatpush1.msra.mxu0 %v557
        %629 = vmatprep.mubr.f32.mxu0 %v519
        %630 = vmatmul.mubr.f32.gmra.mrb[0].mxu0 %v518
        %v631 = vpop.f32.mrb[0].mxu0
        %v632 = vadd.f32 %v563, %v631
        %v633 = vpop.f32.mrb[0].mxu0
        %634 = vmatprep.mubr.f32.mxu0 %v521
        %635 = vmatmul.mubr.f32.gmra.mrb[0].mxu0 %v520
        %v636 = vpop.f32.mrb[0].mxu0
        %v637 = vadd.f32 %v563, %v636
        %v638 = vpop.f32.mrb[0].mxu0
        %639 = vmatprep.mubr.f32.mxu0 %v523
        %640 = vmatmul.mubr.f32.gmra.mrb[0].mxu0 %v522
        %v641 = vpop.f32.mrb[0].mxu0
        %v642 = vadd.f32 %v563, %v641
        %v643 = vpop.f32.mrb[0].mxu0
        %644 = vmatprep.mubr.f32.mxu0 %v525
        %645 = vmatmul.mubr.f32.gmra.mrb[0].mxu0 %v524
        %v646 = vpop.f32.mrb[0].mxu0
        %v647 = vadd.f32 %v563, %v646
        %v648 = vpop.f32.mrb[0].mxu0
        %649 = vdwg.mxu0
        %650 = vst [vmem:[%s378] sm:$0xff] %v632
        %651 = vst [vmem:[%s378 + $0x8] sm:$0xff] %v637
        %652 = vst [vmem:[%s378 + $0x10] sm:$0xff] %v642
        %653 = vst [vmem:[%s378 + $0x18] sm:$0xff] %v647
        %v654 = vld [vmem:[%s6] sm:$0xff]
        %v655 = vld [vmem:[%s6 + $0x8] sm:$0xff]
        %v656 = vld [vmem:[%s6 + $0x10] sm:$0xff]
        %v657 = vld [vmem:[%s6 + $0x18] sm:$0xff]
        %v658 = vld [vmem:[%s6 + $0x20] sm:$0xff]
        %v659 = vld [vmem:[%s6 + $0x28] sm:$0xff]
        %v660 = vld [vmem:[%s6 + $0x30] sm:$0xff]
        %v661 = vld [vmem:[%s6 + $0x38] sm:$0xff]
        %v662 = vld [vmem:[%s6 + $0x40] sm:$0xff]
        %v663 = vld [vmem:[%s6 + $0x48] sm:$0xff]
        %v664 = vld [vmem:[%s6 + $0x50] sm:$0xff]
        %v665 = vld [vmem:[%s6 + $0x58] sm:$0xff]
        %v666 = vld [vmem:[%s6 + $0x60] sm:$0xff]
        %v667 = vld [vmem:[%s6 + $0x68] sm:$0xff]
        %v668 = vld [vmem:[%s6 + $0x70] sm:$0xff]
        %v669 = vld [vmem:[%s6 + $0x78] sm:$0xff]
        %v670 = vld [vmem:[%s6 + $0x80] sm:$0xff]
        %v671 = vld [vmem:[%s6 + $0x88] sm:$0xff]
        %v672 = vld [vmem:[%s6 + $0x90] sm:$0xff]
        %v673 = vld [vmem:[%s6 + $0x98] sm:$0xff]
        %v674 = vld [vmem:[%s6 + $0xa0] sm:$0xff]
        %v675 = vld [vmem:[%s6 + $0xa8] sm:$0xff]
        %v676 = vld [vmem:[%s6 + $0xb0] sm:$0xff]
        %v677 = vld [vmem:[%s6 + $0xb8] sm:$0xff]
        %v678 = vld [vmem:[%s6 + $0xc0] sm:$0xff]
        %v679 = vld [vmem:[%s6 + $0xc8] sm:$0xff]
        %v680 = vld [vmem:[%s6 + $0xd0] sm:$0xff]
        %v681 = vld [vmem:[%s6 + $0xd8] sm:$0xff]
        %v682 = vld [vmem:[%s6 + $0xe0] sm:$0xff]
        %v683 = vld [vmem:[%s6 + $0xe8] sm:$0xff]
        %v684 = vld [vmem:[%s6 + $0xf0] sm:$0xff]
        %v685 = vld [vmem:[%s6 + $0xf8] sm:$0xff]
        %v686 = vld [vmem:[%s389] sm:$0xff]
        %v687 = vld [vmem:[%s389 + $0x8] sm:$0xff]
        %v688 = vld [vmem:[%s389 + $0x10] sm:$0xff]
        %v689 = vld [vmem:[%s389 + $0x18] sm:$0xff]
        %v690 = vld [vmem:[%s7] sm:$0xff]
        %v691 = vld [vmem:[%s7 + $0x8] sm:$0xff]
        %v692 = vld [vmem:[%s7 + $0x10] sm:$0xff]
        %v693 = vld [vmem:[%s7 + $0x18] sm:$0xff]
        %vm694 = vcmask 261120
        %v696 = vsel %vm694, %v686, 0
        %v699 = vsel %vm694, %v687, 0
        %v702 = vsel %vm694, %v688, 0
        %v705 = vsel %vm694, %v689, 0
        %707 = vmatprep.subr.mxu0 0.0
        %708 = vmatpush1.msra.mxu0 %v690
        %709 = vmatprep.subr.mxu0 0.0
        %710 = vmatpush1.msra.mxu0 %v691
        %711 = vmatprep.subr.mxu0 0.0
        %712 = vmatpush1.msra.mxu0 %v692
        %713 = vmatprep.subr.mxu0 0.0
        %714 = vmatpush1.msra.mxu0 %v693
        %715 = vmatprep.subr.mxu0 0.0
        %716 = vmatpush1.msra.mxu0 0.0
        %717 = vmatprep.subr.mxu0 0.0
        %718 = vmatpush1.msra.mxu0 0.0
        %719 = vmatprep.subr.mxu0 0.0
        %720 = vmatpush1.msra.mxu0 0.0
        %721 = vmatprep.subr.mxu0 0.0
        %722 = vmatpush1.msra.mxu0 0.0
        %723 = vmatprep.subr.mxu0 0.0
        %724 = vmatpush1.msra.mxu0 0.0
        %725 = vmatprep.subr.mxu0 0.0
        %726 = vmatpush1.msra.mxu0 0.0
        %727 = vmatprep.subr.mxu0 0.0
        %728 = vmatpush1.msra.mxu0 0.0
        %729 = vmatprep.subr.mxu0 0.0
        %730 = vmatpush1.msra.mxu0 0.0
        %731 = vmatprep.subr.mxu0 0.0
        %732 = vmatpush1.msra.mxu0 0.0
        %733 = vmatprep.subr.mxu0 0.0
        %734 = vmatpush1.msra.mxu0 0.0
        %735 = vmatprep.subr.mxu0 0.0
        %736 = vmatpush1.msra.mxu0 0.0
        %737 = vmatprep.subr.mxu0 0.0
        %738 = vmatpush1.msra.mxu0 0.0
        %739 = vmatprep.subr.mxu0 0.0
        %740 = vmatpush1.msra.mxu0 0.0
        %741 = vmatprep.subr.mxu0 0.0
        %742 = vmatpush1.msra.mxu0 0.0
        %743 = vmatprep.subr.mxu0 0.0
        %744 = vmatpush1.msra.mxu0 0.0
        %745 = vmatprep.subr.mxu0 0.0
        %746 = vmatpush1.msra.mxu0 0.0
        %747 = vmatprep.subr.mxu0 0.0
        %748 = vmatpush1.msra.mxu0 0.0
        %749 = vmatprep.subr.mxu0 0.0
        %750 = vmatpush1.msra.mxu0 0.0
        %751 = vmatprep.subr.mxu0 0.0
        %752 = vmatpush1.msra.mxu0 0.0
        %753 = vmatprep.subr.mxu0 0.0
        %754 = vmatpush1.msra.mxu0 0.0
        %755 = vmatprep.subr.mxu0 0.0
        %756 = vmatpush1.msra.mxu0 0.0
        %757 = vmatprep.subr.mxu0 0.0
        %758 = vmatpush1.msra.mxu0 0.0
        %759 = vmatprep.subr.mxu0 0.0
        %760 = vmatpush1.msra.mxu0 0.0
        %761 = vmatprep.subr.mxu0 0.0
        %762 = vmatpush1.msra.mxu0 0.0
        %763 = vmatprep.subr.mxu0 0.0
        %764 = vmatpush1.msra.mxu0 0.0
        %765 = vmatprep.subr.mxu0 0.0
        %766 = vmatpush1.msra.mxu0 0.0
        %767 = vmatprep.subr.mxu0 0.0
        %768 = vmatpush1.msra.mxu0 0.0
        %769 = vmatprep.subr.mxu0 0.0
        %770 = vmatpush1.msra.mxu0 0.0
        %771 = vmatprep.mubr.f32.mxu0 0.0
        %772 = vmatmul.mubr.f32.gmra.mrb[0].mxu0 %v696
        %v773 = vpop.f32.mrb[0].mxu0
        %v774 = vadd.f32 0.0, %v773
        %v775 = vpop.f32.mrb[0].mxu0
        %776 = vmatprep.mubr.f32.mxu0 0.0
        %777 = vmatmul.mubr.f32.gmra.mrb[0].mxu0 %v699
        %v778 = vpop.f32.mrb[0].mxu0
        %v779 = vadd.f32 0.0, %v778
        %v780 = vpop.f32.mrb[0].mxu0
        %781 = vmatprep.mubr.f32.mxu0 0.0
        %782 = vmatmul.mubr.f32.gmra.mrb[0].mxu0 %v702
        %v783 = vpop.f32.mrb[0].mxu0
        %v784 = vadd.f32 0.0, %v783
        %v785 = vpop.f32.mrb[0].mxu0
        %786 = vmatprep.mubr.f32.mxu0 0.0
        %787 = vmatmul.mubr.f32.gmra.mrb[0].mxu0 %v705
        %v788 = vpop.f32.mrb[0].mxu0
        %v789 = vadd.f32 0.0, %v788
        %v790 = vpop.f32.mrb[0].mxu0
        %791 = vdwg.mxu0
        %792 = vmatprep.subr.mxu0 0.0
        %793 = vmatpush1.msra.mxu0 %v654
        %794 = vmatprep.subr.mxu0 0.0
        %795 = vmatpush1.msra.mxu0 %v655
        %796 = vmatprep.subr.mxu0 0.0
        %797 = vmatpush1.msra.mxu0 %v656
        %798 = vmatprep.subr.mxu0 0.0
        %799 = vmatpush1.msra.mxu0 %v657
        %800 = vmatprep.subr.mxu0 0.0
        %801 = vmatpush1.msra.mxu0 %v658
        %802 = vmatprep.subr.mxu0 0.0
        %803 = vmatpush1.msra.mxu0 %v659
        %804 = vmatprep.subr.mxu0 0.0
        %805 = vmatpush1.msra.mxu0 %v660
        %806 = vmatprep.subr.mxu0 0.0
        %807 = vmatpush1.msra.mxu0 %v661
        %808 = vmatprep.subr.mxu0 0.0
        %809 = vmatpush1.msra.mxu0 %v662
        %810 = vmatprep.subr.mxu0 0.0
        %811 = vmatpush1.msra.mxu0 %v663
        %812 = vmatprep.subr.mxu0 0.0
        %813 = vmatpush1.msra.mxu0 %v664
        %814 = vmatprep.subr.mxu0 0.0
        %815 = vmatpush1.msra.mxu0 %v665
        %816 = vmatprep.subr.mxu0 0.0
        %817 = vmatpush1.msra.mxu0 %v666
        %818 = vmatprep.subr.mxu0 0.0
        %819 = vmatpush1.msra.mxu0 %v667
        %820 = vmatprep.subr.mxu0 0.0
        %821 = vmatpush1.msra.mxu0 %v668
        %822 = vmatprep.subr.mxu0 0.0
        %823 = vmatpush1.msra.mxu0 %v669
        %824 = vmatprep.subr.mxu0 0.0
        %825 = vmatpush1.msra.mxu0 %v670
        %826 = vmatprep.subr.mxu0 0.0
        %827 = vmatpush1.msra.mxu0 %v671
        %828 = vmatprep.subr.mxu0 0.0
        %829 = vmatpush1.msra.mxu0 %v672
        %830 = vmatprep.subr.mxu0 0.0
        %831 = vmatpush1.msra.mxu0 %v673
        %832 = vmatprep.subr.mxu0 0.0
        %833 = vmatpush1.msra.mxu0 %v674
        %834 = vmatprep.subr.mxu0 0.0
        %835 = vmatpush1.msra.mxu0 %v675
        %836 = vmatprep.subr.mxu0 0.0
        %837 = vmatpush1.msra.mxu0 %v676
        %838 = vmatprep.subr.mxu0 0.0
        %839 = vmatpush1.msra.mxu0 %v677
        %840 = vmatprep.subr.mxu0 0.0
        %841 = vmatpush1.msra.mxu0 %v678
        %842 = vmatprep.subr.mxu0 0.0
        %843 = vmatpush1.msra.mxu0 %v679
        %844 = vmatprep.subr.mxu0 0.0
        %845 = vmatpush1.msra.mxu0 %v680
        %846 = vmatprep.subr.mxu0 0.0
        %847 = vmatpush1.msra.mxu0 %v681
        %848 = vmatprep.subr.mxu0 0.0
        %849 = vmatpush1.msra.mxu0 %v682
        %850 = vmatprep.subr.mxu0 0.0
        %851 = vmatpush1.msra.mxu0 %v683
        %852 = vmatprep.subr.mxu0 0.0
        %853 = vmatpush1.msra.mxu0 %v684
        %854 = vmatprep.subr.mxu0 0.0
        %855 = vmatpush1.msra.mxu0 %v685
        %856 = vmatprep.mubr.f32.mxu0 %v519
        %857 = vmatmul.mubr.f32.gmra.mrb[0].mxu0 %v518
        %v858 = vpop.f32.mrb[0].mxu0
        %v859 = vadd.f32 %v774, %v858
        %v860 = vpop.f32.mrb[0].mxu0
        %861 = vmatprep.mubr.f32.mxu0 %v521
        %862 = vmatmul.mubr.f32.gmra.mrb[0].mxu0 %v520
        %v863 = vpop.f32.mrb[0].mxu0
        %v864 = vadd.f32 %v779, %v863
        %v865 = vpop.f32.mrb[0].mxu0
        %866 = vmatprep.mubr.f32.mxu0 %v523
        %867 = vmatmul.mubr.f32.gmra.mrb[0].mxu0 %v522
        %v868 = vpop.f32.mrb[0].mxu0
        %v869 = vadd.f32 %v784, %v868
        %v870 = vpop.f32.mrb[0].mxu0
        %871 = vmatprep.mubr.f32.mxu0 %v525
        %872 = vmatmul.mubr.f32.gmra.mrb[0].mxu0 %v524
        %v873 = vpop.f32.mrb[0].mxu0
        %v874 = vadd.f32 %v789, %v873
        %v875 = vpop.f32.mrb[0].mxu0
        %876 = vdwg.mxu0
        %s877 = sld [smem:[#allocation2]]
        %v878 = vstv %s877
        %v879 = vadd.f32 %v859, %v878
        %v880 = vadd.f32 %v864, %v878
        %v881 = vadd.f32 %v869, %v878
        %v882 = vadd.f32 %v874, %v878
        %vm883 = vcmask 7168
        %884 = vst.msk [vmem:[%s395] sm:$0xff] %vm883, %v879
        %885 = vst.msk [vmem:[%s395 + $0x8] sm:$0xff] %vm883, %v880
        %886 = vst.msk [vmem:[%s395 + $0x10] sm:$0xff] %vm883, %v881
        %887 = vst.msk [vmem:[%s395 + $0x18] sm:$0xff] %vm883, %v882
        %s888 = smul.u32 4, %s26
        %p889 = scmp.lt.s32.totalorder %s888, 15
        %s890 = scalar_select %p889, %s888, 15
        %s891 = smul.addr %s890, 8
        %s892 = scalar_lea.vmem %s9, %s891
        %s893 = sand.u32 %s259, 1
        %s894 = scalar_lea.sflag [#allocation4], %s893
        %s895 = sand.u32 %s259, 1
        %s896 = smul.addr %s895, 32
        %s897 = scalar_lea.vmem [#allocation3], %s896
        // Predicated region
        $region57: #{tpu_custom_call.1} parent=55 // pred_check
          %p898 = pneg %p243
        $region58: #{tpu_custom_call.1} parent=55 // pred_check_branch
          %900 = sbr.rel (%p898) target = $region60
        $region59: #{tpu_custom_call.1} parent=55 // pred_region
          %s901 = smul.u32 4, %s26
        $region60: #{tpu_custom_call.1} parent=55 // pred_fallthru
          _
        // Predicated region
        $region61: #{tpu_custom_call.1} parent=55 // pred_check
          %p902 = pneg %p269
        $region62: #{tpu_custom_call.1} parent=55 // pred_check_branch
          %904 = sbr.rel (%p902) target = $region64
        $region63: #{tpu_custom_call.1} parent=55 // pred_region
          %s905 = smul.u32 4, %s26
          %s907 = ssub.s32 512, 512
          %908 = vsyncadd %s894, %s907
          %s909 = smul.addr %s905, 128
          %s910 = scalar_lea.hbm %s10, %s909
          %s911 = sshll.u32 %s897, 4
          %s912 = int_to_ptr.vmem [resolvable:$true] %s911
          %917 = dma.vmem_to_hbm [thread:$0]  %s912, 512, %s910, %s894, 128, 128, 8
        $region64: #{tpu_custom_call.1} parent=55 // pred_fallthru
          _
      $region56: #{tpu_custom_call.1} parent=5 // pred_fallthru
        _
      %p918 = scmp.le.s32.totalorder 2, %s21
      // Predicated region
      $region65: #{tpu_custom_call.1} parent=5 // pred_check
        %p919 = pneg %p918
      $region66: #{tpu_custom_call.1} parent=5 // pred_check_branch
        %921 = sbr.rel (%p919) target = $region68
      $region67: #{tpu_custom_call.1} parent=5 // pred_region
        %s922 = ssub.s32 %s21, 2
        // Predicated region
        $region69: #{tpu_custom_call.1} parent=67 // pred_check
          %p923 = pneg %p249
        $region70: #{tpu_custom_call.1} parent=67 // pred_check_branch
          %925 = sbr.rel (%p923) target = $region72
        $region71: #{tpu_custom_call.1} parent=67 // pred_region
          %s926 = smul.u32 4, %s27
          %p927 = scmp.lt.s32.totalorder %s926, 15
          %s928 = scalar_select %p927, %s926, 15
          %s929 = smul.addr %s928, 8
          %s930 = scalar_lea.vmem %s9, %s929
        $region72: #{tpu_custom_call.1} parent=67 // pred_fallthru
          _
        // Predicated region
        $region73: #{tpu_custom_call.1} parent=67 // pred_check
          %p931 = pneg %p275
        $region74: #{tpu_custom_call.1} parent=67 // pred_check_branch
          %933 = sbr.rel (%p931) target = $region76
        $region75: #{tpu_custom_call.1} parent=67 // pred_region
          %s934 = sand.u32 %s260, 1
          %s935 = scalar_lea.sflag [#allocation4], %s934
          %s936 = sand.u32 %s260, 1
          %s937 = smul.addr %s936, 32
          %s938 = scalar_lea.vmem [#allocation3], %s937
          %939 = dma.done %s935, 512
        $region76: #{tpu_custom_call.1} parent=67 // pred_fallthru
          _
      $region68: #{tpu_custom_call.1} parent=5 // pred_fallthru
        _
    $region6: #{tpu_custom_call.1} parent=1 // loop_footer
      %s25 = sadd.s32 1, %s21
    $region7: #{tpu_custom_call.1} parent=1 // loop_footer_branch
      %20 = sbr.rel target = $region3
    $region8: #{tpu_custom_call.1} parent=1 // loop_exit
      _
    %940 = vsyncpa [#allocation4], 1
    %s941 = scalar_lea.sflag [#allocation4], 1
    %942 = vsyncpa %s941, 1

</llo_original>
